<compile_context>
chip_gen: v5e
topology: v5e:2x2
jax: 0.10.0
libtpu: 0.0.40
codegen_flags: <defaults>
</compile_context>

<pallas_src>
import functools
import math

import jax
import jax.numpy as jnp
from jax import lax
from jax.experimental import pallas as pl
from jax.experimental.pallas import tpu as pltpu


def _downsample_kernel(xs_ref, w_ref, b_ref, out_ref, *, Cp, C4, Ho, Wo):
    # xs_ref : (1, Ho+1, Wo+1, C4)  phase-split padded input, chan q = (rp*2+cp)*C + c
    # w_ref  : (4, Cp, C4)          per-window-offset weight (zero-padded phases/rows)
    # b_ref  : (Cp, 1)
    # out_ref: (1, Cp, Ho*Wo)
    acc = jnp.zeros((Cp, Ho * Wo), jnp.float32) + b_ref[...]
    for off, (oy, ox) in enumerate(((0, 0), (0, 1), (1, 0), (1, 1))):
        # stride-1 window of the phase planes, flattened spatially (minor dim kept).
        slab = xs_ref[0, oy:oy + Ho, ox:ox + Wo, :].reshape(Ho * Wo, C4)
        # (Cp, C4) . (Ho*Wo, C4)^T -> (Cp, Ho*Wo): lanes carry the spatial dim.
        acc = acc + lax.dot_general(
            w_ref[off], slab,
            dimension_numbers=(((1,), (1,)), ((), ())),
            preferred_element_type=jnp.float32)
    out_ref[0] = acc.astype(out_ref.dtype)


def downsample(x, weight, bias):
    """x: (B, C, H, W); weight: (C, C, 3, 3); bias: (C,). Conv2d stride=2, pad=1."""
    B, Cin, H, W = x.shape
    Cout = weight.shape[0]
    K, S, P = 3, 2, 1
    Ho = (H + 2 * P - K) // S + 1
    Wo = (W + 2 * P - K) // S + 1
    Hh, Wh = Ho + 1, Wo + 1          # phase-plane spatial extents
    C4 = 4 * Cin                     # 2x2 phases folded into the channel (lane) dim
    Cp = ((Cout + 7) // 8) * 8       # sublane-aligned output channel count

    # Pad so the padded spatial extent is exactly (2*Hh, 2*Wh), then split the
    # even/odd row/col phases into the minor channel dim:
    #   xs[b, rh, ch, (rp*2+cp)*Cin + c] == xpad[b, c, 2*rh+rp, 2*ch+cp]
    xp = jnp.pad(x, ((0, 0), (0, 0), (P, 2 * Hh - H - P), (P, 2 * Wh - W - P)))
    xs = xp.reshape(B, Cin, Hh, 2, Wh, 2).transpose(0, 2, 4, 3, 5, 1)
    xs = xs.reshape(B, Hh, Wh, C4)

    # Per window-offset weight:
    #   w4[oy*2+ox, o, (rp*2+cp)*Cin + c] = weight[o, c, 2*oy+rp, 2*ox+cp]
    # (zero where 2*oy+rp > 2 or 2*ox+cp > 2, and for padded rows o >= Cout).
    w4 = jnp.zeros((2, 2, Cp, 2, 2, Cin), weight.dtype)
    for dy in range(K):
        for dx in range(K):
            w4 = w4.at[dy // 2, dx // 2, :Cout, dy % 2, dx % 2, :].set(
                weight[:, :, dy, dx])
    w4 = w4.reshape(4, Cp, C4)
    b2 = jnp.pad(bias.reshape(Cout, 1).astype(jnp.float32),
                 ((0, Cp - Cout), (0, 0)))

    kernel = functools.partial(_downsample_kernel, Cp=Cp, C4=C4, Ho=Ho, Wo=Wo)
    out = pl.pallas_call(
        kernel,
        out_shape=jax.ShapeDtypeStruct((B, Cp, Ho * Wo), x.dtype),
        grid=(B,),
        in_specs=[
            pl.BlockSpec((1, Hh, Wh, C4), lambda b: (b, 0, 0, 0)),
            pl.BlockSpec((4, Cp, C4), lambda b: (0, 0, 0)),
            pl.BlockSpec((Cp, 1), lambda b: (0, 0)),
        ],
        out_specs=pl.BlockSpec((1, Cp, Ho * Wo), lambda b: (b, 0, 0)),
        compiler_params=pltpu.CompilerParams(dimension_semantics=("parallel",)),
    )(xs, w4, b2)

    # Drop the alignment-padding rows; reshape of the contiguous spatial dim is free.
    return out[:, :Cout, :].reshape(B, Cout, Ho, Wo)


def _reference(x, weight, bias):
    """Pure-JAX reference matching the PyTorch forward exactly."""
    y = lax.conv_general_dilated(
        x, weight, window_strides=(2, 2), padding=[(1, 1), (1, 1)],
        dimension_numbers=("NCHW", "OIHW", "NCHW"))
    return y + bias[None, :, None, None]


if __name__ == "__main__":
    B, C, H, W, K = 2, 4, 16, 16, 3

    key = jax.random.PRNGKey(0)
    k_w, k_b, k_x = jax.random.split(key, 3)

    # Deterministic Conv2d-style init: weight (C, C, K, K), bias (C,)
    fan_in = C * K * K
    bound = 1.0 / math.sqrt(fan_in)
    weight = jax.random.uniform(k_w, (C, C, K, K), jnp.float32, -bound, bound)
    bias = jax.random.uniform(k_b, (C,), jnp.float32, -bound, bound)
    x = jax.random.normal(k_x, (B, C, H, W), jnp.float32)

    out = jax.block_until_ready(downsample(x, weight, bias))
    ref = jax.block_until_ready(_reference(x, weight, bias))

    assert out.shape == (B, C, H // 2, W // 2), out.shape
    assert jnp.allclose(out, ref, atol=1e-4, rtol=1e-4), (
        float(jnp.max(jnp.abs(out - ref))))
    print("KERNEL_OK")
</pallas_src>

<mosaic_0001>
module attributes {stable_mosaic.version = 11 : i64} {
  func.func @_downsample_kernel(%arg0: i32, %arg1: memref<1x9x9x16xf32, #tpu.memory_space<vmem>>, %arg2: memref<4x8x16xf32, #tpu.memory_space<vmem>>, %arg3: memref<8x1xf32, #tpu.memory_space<vmem>>, %arg4: memref<1x8x64xf32, #tpu.memory_space<vmem>>) attributes {dimension_semantics = [#tpu.dimension_semantics<parallel>], iteration_bounds = array<i64: 2>, scalar_prefetch = 0 : i64, scratch_operands = 0 : i64, tpu.core_type = #tpu.core_type<tc>, window_params = [{transform_indices = @transform_0, window_bounds = array<i64: 1, 9, 9, 16>}, {pipeline_mode = #tpu.pipeline_mode<synchronous>, transform_indices = @transform_1, window_bounds = array<i64: 4, 8, 16>}, {pipeline_mode = #tpu.pipeline_mode<synchronous>, transform_indices = @transform_2, window_bounds = array<i64: 8, 1>}, {transform_indices = @transform_3, window_bounds = array<i64: 1, 8, 64>}]} {
    %cst = arith.constant 0.000000e+00 : f32
    %0 = vector.broadcast %cst : f32 to vector<8x64xf32>
    %c0 = arith.constant 0 : index
    %c0_0 = arith.constant 0 : index
    %1 = vector.load %arg3[%c0, %c0_0] : memref<8x1xf32, #tpu.memory_space<vmem>>, vector<8x1xf32>
    %2 = vector.broadcast %1 : vector<8x1xf32> to vector<8x64xf32>
    %3 = arith.addf %0, %2 : vector<8x64xf32>
    %c0_1 = arith.constant 0 : index
    %c0_2 = arith.constant 0 : index
    %c0_3 = arith.constant 0 : index
    %c0_4 = arith.constant 0 : index
    %4 = vector.load %arg1[%c0_1, %c0_2, %c0_3, %c0_4] : memref<1x9x9x16xf32, #tpu.memory_space<vmem>>, vector<1x8x8x16xf32>
    %5 = vector.shape_cast %4 : vector<1x8x8x16xf32> to vector<8x8x16xf32>
    %6 = vector.shape_cast %5 : vector<8x8x16xf32> to vector<64x16xf32>
    %c0_5 = arith.constant 0 : index
    %c0_6 = arith.constant 0 : index
    %c0_7 = arith.constant 0 : index
    %7 = vector.load %arg2[%c0_5, %c0_6, %c0_7] : memref<4x8x16xf32, #tpu.memory_space<vmem>>, vector<1x8x16xf32>
    %8 = vector.shape_cast %7 : vector<1x8x16xf32> to vector<8x16xf32>
    %cst_8 = arith.constant dense<0.000000e+00> : vector<8x64xf32>
    %9 = tpu.matmul %8, %6, %cst_8 {dimension_numbers = #tpu.dot_dimension_numbers<[1], [1], [0], [0], [0, 0, 1, 0], [], []>} : vector<8x16xf32>, vector<64x16xf32>, vector<8x64xf32> -> vector<8x64xf32>
    %10 = arith.addf %3, %9 : vector<8x64xf32>
    %c0_9 = arith.constant 0 : index
    %c0_10 = arith.constant 0 : index
    %c1 = arith.constant 1 : index
    %c0_11 = arith.constant 0 : index
    %11 = vector.load %arg1[%c0_9, %c0_10, %c1, %c0_11] : memref<1x9x9x16xf32, #tpu.memory_space<vmem>>, vector<1x8x8x16xf32>
    %12 = vector.shape_cast %11 : vector<1x8x8x16xf32> to vector<8x8x16xf32>
    %13 = vector.shape_cast %12 : vector<8x8x16xf32> to vector<64x16xf32>
    %c1_12 = arith.constant 1 : index
    %c0_13 = arith.constant 0 : index
    %c0_14 = arith.constant 0 : index
    %14 = vector.load %arg2[%c1_12, %c0_13, %c0_14] : memref<4x8x16xf32, #tpu.memory_space<vmem>>, vector<1x8x16xf32>
    %15 = vector.shape_cast %14 : vector<1x8x16xf32> to vector<8x16xf32>
    %cst_15 = arith.constant dense<0.000000e+00> : vector<8x64xf32>
    %16 = tpu.matmul %15, %13, %cst_15 {dimension_numbers = #tpu.dot_dimension_numbers<[1], [1], [0], [0], [0, 0, 1, 0], [], []>} : vector<8x16xf32>, vector<64x16xf32>, vector<8x64xf32> -> vector<8x64xf32>
    %17 = arith.addf %10, %16 : vector<8x64xf32>
    %c0_16 = arith.constant 0 : index
    %c1_17 = arith.constant 1 : index
    %c0_18 = arith.constant 0 : index
    %c0_19 = arith.constant 0 : index
    %18 = vector.load %arg1[%c0_16, %c1_17, %c0_18, %c0_19] : memref<1x9x9x16xf32, #tpu.memory_space<vmem>>, vector<1x8x8x16xf32>
    %19 = vector.shape_cast %18 : vector<1x8x8x16xf32> to vector<8x8x16xf32>
    %20 = vector.shape_cast %19 : vector<8x8x16xf32> to vector<64x16xf32>
    %c2 = arith.constant 2 : index
    %c0_20 = arith.constant 0 : index
    %c0_21 = arith.constant 0 : index
    %21 = vector.load %arg2[%c2, %c0_20, %c0_21] : memref<4x8x16xf32, #tpu.memory_space<vmem>>, vector<1x8x16xf32>
    %22 = vector.shape_cast %21 : vector<1x8x16xf32> to vector<8x16xf32>
    %cst_22 = arith.constant dense<0.000000e+00> : vector<8x64xf32>
    %23 = tpu.matmul %22, %20, %cst_22 {dimension_numbers = #tpu.dot_dimension_numbers<[1], [1], [0], [0], [0, 0, 1, 0], [], []>} : vector<8x16xf32>, vector<64x16xf32>, vector<8x64xf32> -> vector<8x64xf32>
    %24 = arith.addf %17, %23 : vector<8x64xf32>
    %c0_23 = arith.constant 0 : index
    %c1_24 = arith.constant 1 : index
    %c1_25 = arith.constant 1 : index
    %c0_26 = arith.constant 0 : index
    %25 = vector.load %arg1[%c0_23, %c1_24, %c1_25, %c0_26] : memref<1x9x9x16xf32, #tpu.memory_space<vmem>>, vector<1x8x8x16xf32>
    %26 = vector.shape_cast %25 : vector<1x8x8x16xf32> to vector<8x8x16xf32>
    %27 = vector.shape_cast %26 : vector<8x8x16xf32> to vector<64x16xf32>
    %c3 = arith.constant 3 : index
    %c0_27 = arith.constant 0 : index
    %c0_28 = arith.constant 0 : index
    %28 = vector.load %arg2[%c3, %c0_27, %c0_28] : memref<4x8x16xf32, #tpu.memory_space<vmem>>, vector<1x8x16xf32>
    %29 = vector.shape_cast %28 : vector<1x8x16xf32> to vector<8x16xf32>
    %cst_29 = arith.constant dense<0.000000e+00> : vector<8x64xf32>
    %30 = tpu.matmul %29, %27, %cst_29 {dimension_numbers = #tpu.dot_dimension_numbers<[1], [1], [0], [0], [0, 0, 1, 0], [], []>} : vector<8x16xf32>, vector<64x16xf32>, vector<8x64xf32> -> vector<8x64xf32>
    %31 = arith.addf %24, %30 : vector<8x64xf32>
    %c0_30 = arith.constant 0 : index
    %c0_31 = arith.constant 0 : index
    %c0_32 = arith.constant 0 : index
    %32 = vector.load %arg4[%c0_30, %c0_31, %c0_32] : memref<1x8x64xf32, #tpu.memory_space<vmem>>, vector<1x8x64xf32>
    %33 = vector.shape_cast %32 : vector<1x8x64xf32> to vector<8x64xf32>
    %34 = vector.shape_cast %31 : vector<8x64xf32> to vector<1x8x64xf32>
    tpu.vector_store %arg4[%c0_30, %c0_31, %c0_32], %34 {strides = array<i32>} : memref<1x8x64xf32, #tpu.memory_space<vmem>>, vector<1x8x64xf32>,
    return
  }
  func.func @transform_0(%arg0: i32) -> (i32, i32, i32, i32) {
    %c0_i32 = arith.constant 0 : i32
    %c0_i32_0 = arith.constant 0 : i32
    %c0_i32_1 = arith.constant 0 : i32
    %c0_i32_2 = arith.constant 0 : i32
    return %arg0, %c0_i32, %c0_i32_0, %c0_i32_1 : i32, i32, i32, i32
  }
  func.func @transform_1(%arg0: i32) -> (i32, i32, i32) {
    %c0_i32 = arith.constant 0 : i32
    %c0_i32_0 = arith.constant 0 : i32
    %c0_i32_1 = arith.constant 0 : i32
    %c0_i32_2 = arith.constant 0 : i32
    return %c0_i32, %c0_i32_0, %c0_i32_1 : i32, i32, i32
  }
  func.func @transform_2(%arg0: i32) -> (i32, i32) {
    %c0_i32 = arith.constant 0 : i32
    %c0_i32_0 = arith.constant 0 : i32
    %c0_i32_1 = arith.constant 0 : i32
    return %c0_i32, %c0_i32_0 : i32, i32
  }
  func.func @transform_3(%arg0: i32) -> (i32, i32, i32) {
    %c0_i32 = arith.constant 0 : i32
    %c0_i32_0 = arith.constant 0 : i32
    %c0_i32_1 = arith.constant 0 : i32
    return %arg0, %c0_i32, %c0_i32_0 : i32, i32, i32
  }
}

</mosaic_0001>

<llo_original>
// kernel: tpu_custom_call.1
$region0: #{tpu_custom_call.1}
  #allocation0 [shape = 'u32[]', space=smem, size = 0x4, offset = 0x4, fixed_abs, tag = 'smem constant byte address 0x4 - core index']
  #allocation1 [shape = 'u32[72,128]{1,0:T(1,128)}', space=vmem, size = 0x9000, scoped, tag = 'internal scratch']
  %s0 = inlined_call_operand.vmem [shape: f32[2,9,9,16], index: 0, kind: input, shape index: {}]
  %s1 = inlined_call_operand.vmem [shape: f32[4,8,16], index: 1, kind: input, shape index: {}]
  %s2 = inlined_call_operand.vmem [shape: f32[8,1], index: 2, kind: input, shape index: {}]
  %s3 = inlined_call_operand.hbm [shape: f32[2,8,64], index: 3, kind: output, shape index: {}]
  %s4 = sld [smem:[#allocation0]]
  $region45: #{tpu_custom_call.1} parent=0
    _
  %s6 = ssub.s32 1, %s4
  %s7 = scalar_select 0, %s6, %s4
  $region1: #{tpu_custom_call.1} parent=0
    #allocation2 [shape = 'u8[8192]{0}', space=vmem, size = 0x2000, scoped, tag = 'output window, operand 0']
    #allocation3 [shape = 's32[2]{0}', space=sflag, size = 0x8, scoped, tag = 'scoped memory for tpu_custom_call.1']
    %8 = vsyncpa [#allocation3], 0
    %s9 = scalar_lea.sflag [#allocation3], 1
    %10 = vsyncpa %s9, 0
    loop: start=0, step=1, limit=4
    $region2: #{tpu_custom_call.1} parent=1 // loop_pre_header
      _
    $region3: #{tpu_custom_call.1} parent=1 // loop_header
      %s12 = sphi 0, %s16
      %p13 = scmp.ge.s32.totalorder %s12, 4
      %s22 = sphi 0, %s24
      %s25 = sphi 0, %s22
      %s26 = sphi 0, %s25
      %s42 = sphi 0, %s26
      %s46 = sphi 0, %s46
      %s48 = sphi 0, %s46
      %s49 = sphi 0, %s48
      %s63 = sphi 0, %s49
      %s67 = sphi 0, %s67
      %s69 = sphi 0, %s67
      %s70 = sphi 0, %s69
      %s84 = sphi 0, %s70
      %s90 = sphi 0, %s92
      %s93 = sphi 0, %s90
      %s94 = sphi 0, %s93
      %s110 = sphi 0, %s94
    $region4: #{tpu_custom_call.1} parent=1 // loop_header_branch
      %15 = sbr.rel (%p13) target = $region8
    $region5: #{tpu_custom_call.1} parent=1 // loop_body
      %s17 = ssub.s32 %s12, 1
      %s18 = ssub.s32 %s12, 2
      %s19 = sadd.s32 %s12, 1
      %s20 = ssub.s32 %s12, %s19
      %p21 = scmp.eq.s32.totalorder %s20, 0
      %s23 = sadd.s32 %s22, 1
      %s24 = scalar_select %p21, %s22, %s23
      %p27 = pneg %p21
      %p28 = scmp.eq.s32.totalorder %s12, 1
      %p29 = por %p27, %p28
      %p30 = scmp.ne.s32.totalorder %s22, %s25
      %p31 = scmp.eq.s32.totalorder %s12, 0
      %p32 = por %p30, %p31
      %p33 = scmp.ne.s32.totalorder %s22, %s25
      %p34 = scmp.eq.s32.totalorder %s17, 1
      %p35 = por %p33, %p34
      %p36 = scmp.ne.s32.totalorder %s25, %s26
      %p37 = scmp.eq.s32.totalorder %s17, 0
      %p38 = por %p36, %p37
      %p39 = scmp.ne.s32.totalorder %s25, %s26
      %p40 = scmp.eq.s32.totalorder %s18, 1
      %p41 = por %p39, %p40
      %p43 = scmp.ne.s32.totalorder %s26, %s42
      %p44 = scmp.eq.s32.totalorder %s18, 0
      %p45 = por %p43, %p44
      %s47 = sadd.s32 %s46, 1
      %p50 = scmp.eq.s32.totalorder %s12, 1
      %p51 = scmp.ne.s32.totalorder %s46, %s48
      %p52 = scmp.eq.s32.totalorder %s12, 0
      %p53 = por %p51, %p52
      %p54 = scmp.ne.s32.totalorder %s46, %s48
      %p55 = scmp.eq.s32.totalorder %s17, 1
      %p56 = por %p54, %p55
      %p57 = scmp.ne.s32.totalorder %s48, %s49
      %p58 = scmp.eq.s32.totalorder %s17, 0
      %p59 = por %p57, %p58
      %p60 = scmp.ne.s32.totalorder %s48, %s49
      %p61 = scmp.eq.s32.totalorder %s18, 1
      %p62 = por %p60, %p61
      %p64 = scmp.ne.s32.totalorder %s49, %s63
      %p65 = scmp.eq.s32.totalorder %s18, 0
      %p66 = por %p64, %p65
      %s68 = sadd.s32 %s67, 1
      %p71 = scmp.eq.s32.totalorder %s12, 1
      %p72 = scmp.ne.s32.totalorder %s67, %s69
      %p73 = scmp.eq.s32.totalorder %s12, 0
      %p74 = por %p72, %p73
      %p75 = scmp.ne.s32.totalorder %s67, %s69
      %p76 = scmp.eq.s32.totalorder %s17, 1
      %p77 = por %p75, %p76
      %p78 = scmp.ne.s32.totalorder %s69, %s70
      %p79 = scmp.eq.s32.totalorder %s17, 0
      %p80 = por %p78, %p79
      %p81 = scmp.ne.s32.totalorder %s69, %s70
      %p82 = scmp.eq.s32.totalorder %s18, 1
      %p83 = por %p81, %p82
      %p85 = scmp.ne.s32.totalorder %s70, %s84
      %p86 = scmp.eq.s32.totalorder %s18, 0
      %p87 = por %p85, %p86
      %s88 = ssub.s32 %s12, %s19
      %p89 = scmp.eq.s32.totalorder %s88, 0
      %s91 = sadd.s32 %s90, 1
      %s92 = scalar_select %p89, %s90, %s91
      %p95 = pneg %p89
      %p96 = scmp.eq.s32.totalorder %s12, 1
      %p97 = por %p95, %p96
      %p98 = scmp.ne.s32.totalorder %s90, %s93
      %p99 = scmp.eq.s32.totalorder %s12, 0
      %p100 = por %p98, %p99
      %p101 = scmp.ne.s32.totalorder %s90, %s93
      %p102 = scmp.eq.s32.totalorder %s17, 1
      %p103 = por %p101, %p102
      %p104 = scmp.ne.s32.totalorder %s93, %s94
      %p105 = scmp.eq.s32.totalorder %s17, 0
      %p106 = por %p104, %p105
      %p107 = scmp.ne.s32.totalorder %s93, %s94
      %p108 = scmp.eq.s32.totalorder %s18, 1
      %p109 = por %p107, %p108
      %p111 = scmp.ne.s32.totalorder %s94, %s110
      %p112 = scmp.eq.s32.totalorder %s18, 0
      %p113 = por %p111, %p112
      %p114 = scmp.le.s32.totalorder 1, %s12
      %p115 = scmp.lt.s32.totalorder %s12, 3
      %p116 = pnand %p114, %p115
      %p117 = pneg %p116
      // Predicated region
      $region9: #{tpu_custom_call.1} parent=5 // pred_check
        _
      $region10: #{tpu_custom_call.1} parent=5 // pred_check_branch
        %119 = sbr.rel (%p116) target = $region12
      $region11: #{tpu_custom_call.1} parent=5 // pred_region
        %s120 = ssub.s32 %s12, 1
        // Predicated region
        $region13: #{tpu_custom_call.1} parent=11 // pred_check
          %p121 = pneg %p59
        $region14: #{tpu_custom_call.1} parent=11 // pred_check_branch
          %123 = sbr.rel (%p121) target = $region16
        $region15: #{tpu_custom_call.1} parent=11 // pred_region
          _
        $region16: #{tpu_custom_call.1} parent=11 // pred_fallthru
          _
        // Predicated region
        $region17: #{tpu_custom_call.1} parent=11 // pred_check
          %p124 = pneg %p80
        $region18: #{tpu_custom_call.1} parent=11 // pred_check_branch
          %126 = sbr.rel (%p124) target = $region20
        $region19: #{tpu_custom_call.1} parent=11 // pred_region
          _
        $region20: #{tpu_custom_call.1} parent=11 // pred_fallthru
          _
      $region12: #{tpu_custom_call.1} parent=5 // pred_fallthru
        _
      %p127 = scmp.lt.s32.totalorder %s12, 2
      // Predicated region
      $region21: #{tpu_custom_call.1} parent=5 // pred_check
        %p128 = pneg %p127
      $region22: #{tpu_custom_call.1} parent=5 // pred_check_branch
        %130 = sbr.rel (%p128) target = $region24
      $region23: #{tpu_custom_call.1} parent=5 // pred_region
        // Predicated region
        $region25: #{tpu_custom_call.1} parent=23 // pred_check
          %p131 = pneg %p32
        $region26: #{tpu_custom_call.1} parent=23 // pred_check_branch
          %133 = sbr.rel (%p131) target = $region28
        $region27: #{tpu_custom_call.1} parent=23 // pred_region
          %p134 = scmp.lt.s32.totalorder %s12, 1
          %s135 = scalar_select %p134, %s12, 1
          %s136 = smul.addr %s135, 18
          %s137 = smul.addr %s136, 8
          %s138 = scalar_lea.vmem %s0, %s137
        $region28: #{tpu_custom_call.1} parent=23 // pred_fallthru
          _
      $region24: #{tpu_custom_call.1} parent=5 // pred_fallthru
        _
      %p139 = scmp.le.s32.totalorder 1, %s12
      %p140 = scmp.lt.s32.totalorder %s12, 3
      %p141 = pnand %p139, %p140
      %p142 = pneg %p141
      // Predicated region
      $region29: #{tpu_custom_call.1} parent=5 // pred_check
        _
      $region30: #{tpu_custom_call.1} parent=5 // pred_check_branch
        %144 = sbr.rel (%p141) target = $region32
      $region31: #{tpu_custom_call.1} parent=5 // pred_region
        %s145 = ssub.s32 %s12, 1
        %p146 = scmp.lt.s32.totalorder %s17, 1
        %s147 = scalar_select %p146, %s17, 1
        %s148 = smul.addr %s147, 18
        %s149 = smul.addr %s148, 8
        %s150 = scalar_lea.vmem %s0, %s149
        %p151 = pneg %p38
        %p152 = pneg %p35
        %p153 = pneg %p59
        %p154 = pneg %p56
        %p155 = pneg %p80
        %p156 = pneg %p77
        %p157 = pneg %p106
        %p158 = pneg %p103
        %s159 = sand.u32 %s93, 1
        %s160 = scalar_lea.sflag [#allocation3], %s159
        %s161 = sand.u32 %s93, 1
        %s162 = smul.addr %s161, 8
        %s163 = scalar_lea.vmem [#allocation2], %s162
        %p164 = scmp.lt.s32.totalorder %s17, 1
        %s165 = scalar_select %p164, %s17, 1
        %s166 = smul.addr %s165, 18
        %s167 = smul.addr %s166, 8
        %s168 = scalar_lea.vmem %s0, %s167
        %v169 = vld [vmem:[%s2] sm:$0xff]
        %171 = vset.pattern.permute.xlu0 0
        %172 = vperm.xlu0 %171, %v169
        %v173 = vpop.permute.xlu0 %172
        %v175 = vadd.f32 %v173, 0.0
        %v176 = vld [vmem:[%s168] sm:$0xff]
        %v177 = vld [vmem:[%s168 + $0x10] sm:$0xff]
        %v178 = vld [vmem:[%s168 + $0x20] sm:$0xff]
        %v179 = vld [vmem:[%s168 + $0x30] sm:$0xff]
        %v180 = vld [vmem:[%s168 + $0x40] sm:$0xff]
        %v181 = vld [vmem:[%s168 + $0x50] sm:$0xff]
        %v182 = vld [vmem:[%s168 + $0x60] sm:$0xff]
        %v183 = vld [vmem:[%s168 + $0x70] sm:$0xff]
        %v184 = vld [vmem:[%s1] sm:$0xff]
        %vm185 = vcmask 130048
        %v187 = vsel %vm185, %v184, 0
        %v190 = vsel %vm185, %v176, 0
        %v193 = vsel %vm185, %v177, 0
        %v196 = vsel %vm185, %v178, 0
        %v199 = vsel %vm185, %v179, 0
        %v202 = vsel %vm185, %v180, 0
        %v205 = vsel %vm185, %v181, 0
        %v208 = vsel %vm185, %v182, 0
        %v211 = vsel %vm185, %v183, 0
        %213 = vmatpush.xpose.msra.mxu0 0.0
        %214 = vmatpush.xpose.msra.mxu0 0.0
        %215 = vmatpush.xpose.msra.mxu0 0.0
        %216 = vmatpush.xpose.msra.mxu0 0.0
        %217 = vmatpush.xpose.msra.mxu0 0.0
        %218 = vmatpush.xpose.msra.mxu0 0.0
        %219 = vmatpush.xpose.msra.mxu0 0.0
        %220 = vmatpush.xpose.msra.mxu0 0.0
        %221 = vmatpush.xpose.msra.mxu0 %v211
        %222 = vmatpush.xpose.msra.mxu0 %v208
        %223 = vmatpush.xpose.msra.mxu0 %v205
        %224 = vmatpush.xpose.msra.mxu0 %v202
        %225 = vmatpush.xpose.msra.mxu0 %v199
        %226 = vmatpush.xpose.msra.mxu0 %v196
        %227 = vmatpush.xpose.msra.mxu0 %v193
        %228 = vmatpush.xpose.msra.mxu0 %v190
        %229 = vmatmul.f32.gmra.mxu0 %v187
        %v230 = vpop.f32.mrf.mxu0
        %v231 = vadd.f32 0.0, %v230
        %232 = vdwg.mxu0
        %v233 = vadd.f32 %v175, %v231
        %v234 = vld [vmem:[%s168 + $0x1] sm:$0xff]
        %v235 = vld [vmem:[%s168 + $0x11] sm:$0xff]
        %v236 = vld [vmem:[%s168 + $0x21] sm:$0xff]
        %v237 = vld [vmem:[%s168 + $0x31] sm:$0xff]
        %v238 = vld [vmem:[%s168 + $0x41] sm:$0xff]
        %v239 = vld [vmem:[%s168 + $0x51] sm:$0xff]
        %v240 = vld [vmem:[%s168 + $0x61] sm:$0xff]
        %v241 = vld [vmem:[%s168 + $0x71] sm:$0xff]
        %s242 = scalar_lea.vmem %s1, 8
        %v243 = vld [vmem:[%s242] sm:$0xff]
        %v245 = vsel %vm185, %v243, 0
        %v248 = vsel %vm185, %v234, 0
        %v251 = vsel %vm185, %v235, 0
        %v254 = vsel %vm185, %v236, 0
        %v257 = vsel %vm185, %v237, 0
        %v260 = vsel %vm185, %v238, 0
        %v263 = vsel %vm185, %v239, 0
        %v266 = vsel %vm185, %v240, 0
        %v269 = vsel %vm185, %v241, 0
        %271 = vmatpush.xpose.msra.mxu0 0.0
        %272 = vmatpush.xpose.msra.mxu0 0.0
        %273 = vmatpush.xpose.msra.mxu0 0.0
        %274 = vmatpush.xpose.msra.mxu0 0.0
        %275 = vmatpush.xpose.msra.mxu0 0.0
        %276 = vmatpush.xpose.msra.mxu0 0.0
        %277 = vmatpush.xpose.msra.mxu0 0.0
        %278 = vmatpush.xpose.msra.mxu0 0.0
        %279 = vmatpush.xpose.msra.mxu0 %v269
        %280 = vmatpush.xpose.msra.mxu0 %v266
        %281 = vmatpush.xpose.msra.mxu0 %v263
        %282 = vmatpush.xpose.msra.mxu0 %v260
        %283 = vmatpush.xpose.msra.mxu0 %v257
        %284 = vmatpush.xpose.msra.mxu0 %v254
        %285 = vmatpush.xpose.msra.mxu0 %v251
        %286 = vmatpush.xpose.msra.mxu0 %v248
        %287 = vmatmul.f32.gmra.mxu0 %v245
        %v288 = vpop.f32.mrf.mxu0
        %v289 = vadd.f32 0.0, %v288
        %290 = vdwg.mxu0
        %v291 = vadd.f32 %v233, %v289
        %s292 = scalar_lea.vmem %s168, 16
        %v293 = vld [vmem:[%s292] sm:$0xff]
        %v294 = vld [vmem:[%s292 + $0x10] sm:$0xff]
        %v295 = vld [vmem:[%s292 + $0x20] sm:$0xff]
        %v296 = vld [vmem:[%s292 + $0x30] sm:$0xff]
        %v297 = vld [vmem:[%s292 + $0x40] sm:$0xff]
        %v298 = vld [vmem:[%s292 + $0x50] sm:$0xff]
        %v299 = vld [vmem:[%s292 + $0x60] sm:$0xff]
        %v300 = vld [vmem:[%s292 + $0x70] sm:$0xff]
        %s301 = scalar_lea.vmem %s1, 16
        %v302 = vld [vmem:[%s301] sm:$0xff]
        %v304 = vsel %vm185, %v302, 0
        %v307 = vsel %vm185, %v293, 0
        %v310 = vsel %vm185, %v294, 0
        %v313 = vsel %vm185, %v295, 0
        %v316 = vsel %vm185, %v296, 0
        %v319 = vsel %vm185, %v297, 0
        %v322 = vsel %vm185, %v298, 0
        %v325 = vsel %vm185, %v299, 0
        %v328 = vsel %vm185, %v300, 0
        %330 = vmatpush.xpose.msra.mxu0 0.0
        %331 = vmatpush.xpose.msra.mxu0 0.0
        %332 = vmatpush.xpose.msra.mxu0 0.0
        %333 = vmatpush.xpose.msra.mxu0 0.0
        %334 = vmatpush.xpose.msra.mxu0 0.0
        %335 = vmatpush.xpose.msra.mxu0 0.0
        %336 = vmatpush.xpose.msra.mxu0 0.0
        %337 = vmatpush.xpose.msra.mxu0 0.0
        %338 = vmatpush.xpose.msra.mxu0 %v328
        %339 = vmatpush.xpose.msra.mxu0 %v325
        %340 = vmatpush.xpose.msra.mxu0 %v322
        %341 = vmatpush.xpose.msra.mxu0 %v319
        %342 = vmatpush.xpose.msra.mxu0 %v316
        %343 = vmatpush.xpose.msra.mxu0 %v313
        %344 = vmatpush.xpose.msra.mxu0 %v310
        %345 = vmatpush.xpose.msra.mxu0 %v307
        %346 = vmatmul.f32.gmra.mxu0 %v304
        %v347 = vpop.f32.mrf.mxu0
        %v348 = vadd.f32 0.0, %v347
        %349 = vdwg.mxu0
        %v350 = vadd.f32 %v291, %v348
        %v351 = vld [vmem:[%s292 + $0x1] sm:$0xff]
        %v352 = vld [vmem:[%s292 + $0x11] sm:$0xff]
        %v353 = vld [vmem:[%s292 + $0x21] sm:$0xff]
        %v354 = vld [vmem:[%s292 + $0x31] sm:$0xff]
        %v355 = vld [vmem:[%s292 + $0x41] sm:$0xff]
        %v356 = vld [vmem:[%s292 + $0x51] sm:$0xff]
        %v357 = vld [vmem:[%s292 + $0x61] sm:$0xff]
        %v358 = vld [vmem:[%s292 + $0x71] sm:$0xff]
        %s359 = scalar_lea.vmem %s1, 24
        %v360 = vld [vmem:[%s359] sm:$0xff]
        %v362 = vsel %vm185, %v360, 0
        %v365 = vsel %vm185, %v351, 0
        %v368 = vsel %vm185, %v352, 0
        %v371 = vsel %vm185, %v353, 0
        %v374 = vsel %vm185, %v354, 0
        %v377 = vsel %vm185, %v355, 0
        %v380 = vsel %vm185, %v356, 0
        %v383 = vsel %vm185, %v357, 0
        %v386 = vsel %vm185, %v358, 0
        %388 = vmatpush.xpose.msra.mxu0 0.0
        %389 = vmatpush.xpose.msra.mxu0 0.0
        %390 = vmatpush.xpose.msra.mxu0 0.0
        %391 = vmatpush.xpose.msra.mxu0 0.0
        %392 = vmatpush.xpose.msra.mxu0 0.0
        %393 = vmatpush.xpose.msra.mxu0 0.0
        %394 = vmatpush.xpose.msra.mxu0 0.0
        %395 = vmatpush.xpose.msra.mxu0 0.0
        %396 = vmatpush.xpose.msra.mxu0 %v386
        %397 = vmatpush.xpose.msra.mxu0 %v383
        %398 = vmatpush.xpose.msra.mxu0 %v380
        %399 = vmatpush.xpose.msra.mxu0 %v377
        %400 = vmatpush.xpose.msra.mxu0 %v374
        %401 = vmatpush.xpose.msra.mxu0 %v371
        %402 = vmatpush.xpose.msra.mxu0 %v368
        %403 = vmatpush.xpose.msra.mxu0 %v365
        %404 = vmatmul.f32.gmra.mxu0 %v362
        %v405 = vpop.f32.mrf.mxu0
        %v406 = vadd.f32 0.0, %v405
        %407 = vdwg.mxu0
        %v408 = vadd.f32 %v350, %v406
        %vm409 = vcmask 523264
        %410 = vst.msk [vmem:[%s163] sm:$0xff] %vm409, %v408
        %s411 = sand.u32 %s93, 1
        %s412 = scalar_lea.sflag [#allocation3], %s411
        %s413 = sand.u32 %s93, 1
        %s414 = smul.addr %s413, 8
        %s415 = scalar_lea.vmem [#allocation2], %s414
        // Predicated region
        $region33: #{tpu_custom_call.1} parent=31 // pred_check
          %p416 = pneg %p103
        $region34: #{tpu_custom_call.1} parent=31 // pred_check_branch
          %418 = sbr.rel (%p416) target = $region36
        $region35: #{tpu_custom_call.1} parent=31 // pred_region
          %420 = vsyncadd %s412, 0
          %s421 = smul.addr %s17, 8
          %s422 = scalar_lea.hbm %s3, %s421
          %s424 = sshll.u32 %s415, 4
          %s425 = int_to_ptr.vmem [resolvable:$true] %s424
          %s426 = sshll.u32 %s422, 4
          %s427 = int_to_ptr.hbm [resolvable:$true] %s426
          %429 = dma.vmem_to_hbm [thread:$0]  %s425, 128, %s427, %s412
        $region36: #{tpu_custom_call.1} parent=31 // pred_fallthru
          _
      $region32: #{tpu_custom_call.1} parent=5 // pred_fallthru
        _
      %p430 = scmp.le.s32.totalorder 2, %s12
      // Predicated region
      $region37: #{tpu_custom_call.1} parent=5 // pred_check
        %p431 = pneg %p430
      $region38: #{tpu_custom_call.1} parent=5 // pred_check_branch
        %433 = sbr.rel (%p431) target = $region40
      $region39: #{tpu_custom_call.1} parent=5 // pred_region
        %s434 = ssub.s32 %s12, 2
        // Predicated region
        $region41: #{tpu_custom_call.1} parent=39 // pred_check
          %p435 = pneg %p109
        $region42: #{tpu_custom_call.1} parent=39 // pred_check_branch
          %437 = sbr.rel (%p435) target = $region44
        $region43: #{tpu_custom_call.1} parent=39 // pred_region
          %s438 = sand.u32 %s94, 1
          %s439 = scalar_lea.sflag [#allocation3], %s438
          %s440 = sand.u32 %s94, 1
          %s441 = smul.addr %s440, 8
          %s442 = scalar_lea.vmem [#allocation2], %s441
          %444 = dma.done %s439, 128
        $region44: #{tpu_custom_call.1} parent=39 // pred_fallthru
          _
      $region40: #{tpu_custom_call.1} parent=5 // pred_fallthru
        _
    $region6: #{tpu_custom_call.1} parent=1 // loop_footer
      %s16 = sadd.s32 1, %s12
    $region7: #{tpu_custom_call.1} parent=1 // loop_footer_branch
      %11 = sbr.rel target = $region3
    $region8: #{tpu_custom_call.1} parent=1 // loop_exit
      _
    %445 = vsyncpa [#allocation3], 1
    %s446 = scalar_lea.sflag [#allocation3], 1
    %447 = vsyncpa %s446, 1

</llo_original>
